<compile_context>
chip_gen: v6e
topology: v6e:2x2x1
jax: 0.10.0
libtpu: 0.0.40
codegen_flags: <defaults>
</compile_context>

<pallas_src>
import functools

import jax
import jax.numpy as jnp
from jax import lax
from jax.experimental import pallas as pl
from jax.experimental.pallas import tpu as pltpu


def _fused_double_conv_kernel(x_ref, w1_ref, w2_ref, b_ref, m_ref, o_ref, *, H, W):
    """Fused [Conv3x3(no bias) -> folded BN -> LeakyReLU(0.1)] x 2, one image.

    Layouts (lane-dense, derived from NCHW without any HBM transpose):
      x_ref : (C_pad, H*W)       image `n` of the grid, channels x pixels
      w1_ref: (C_pad, 9*C_pad)   layer-1 im2col weights (BN scale folded), bf16
                                 column index = (dy*3 + dx)*C_pad + ci
      w2_ref: (C_pad, 9*C_pad)   layer-2 weights, same layout, bf16
      b_ref : (C_pad, 2)         folded BN biases (col 0 = layer 1, col 1 = layer 2)
      m_ref : (9, H*W)           per-tap validity masks ('same' zero padding)
      o_ref : (C_pad, H*W)
    """
    f32 = jnp.float32
    P = H * W
    CENTER = 4  # tap (dy=1, dx=1)

    x = x_ref[...].astype(f32)
    w1 = w1_ref[...]                 # bf16, stays bf16 for the MXU
    w2 = w2_ref[...]
    b = b_ref[...].astype(f32)
    masks = m_ref[...].astype(f32)   # (9, P)

    def conv_bn_lrelu(v, w, b_col):
        # v: (C_pad, P) f32; w: (C_pad, 9*C_pad) bf16; b_col: (C_pad, 1) f32
        blocks = []
        for dy in range(3):
            for dx in range(3):
                t = dy * 3 + dx
                s = (dy - 1) * W + (dx - 1)          # flat lane shift of this tap
                if s == 0:                           # center tap
                    sh = v
                else:
                    # XLU circular lane rotation; wrapped lanes are exactly the
                    # out-of-image lanes and are zeroed by the tap mask below.
                    sh = pltpu.roll(v, shift=(-s) % P, axis=1)
                if t != CENTER:
                    sh = sh * masks[t:t + 1, :]      # 'same' zero padding (f32)
                blocks.append(sh)
        patch = jnp.concatenate(blocks, axis=0).astype(jnp.bfloat16)  # (9*C_pad, P)
        acc = jnp.dot(w, patch, preferred_element_type=f32)           # one MXU matmul
        y = acc + b_col                                               # folded BN bias
        return jnp.maximum(y, 0.1 * y)                                # LeakyReLU(0.1)

    y1 = conv_bn_lrelu(x, w1, b[:, 0:1])      # intermediate never leaves VMEM/vregs
    y2 = conv_bn_lrelu(y1, w2, b[:, 1:2])
    o_ref[...] = y2.astype(o_ref.dtype)


def _make_tap_masks(H, W):
    """(9, H*W) f32 validity masks for the 3x3 taps ('same' zero padding)."""
    hh, ww = jnp.meshgrid(jnp.arange(H), jnp.arange(W), indexing="ij")
    hh = hh.reshape(-1)
    ww = ww.reshape(-1)
    rows = []
    for dy in range(3):
        for dx in range(3):
            valid = ((hh + dy - 1 >= 0) & (hh + dy - 1 < H) &
                     (ww + dx - 1 >= 0) & (ww + dx - 1 < W))
            rows.append(valid)
    return jnp.stack(rows, axis=0).astype(jnp.float32)


def conv_block_forward(x_nchw, params):
    """Forward of the PyTorch `conv` module (returns the conv-branch output)."""
    N, C, H, W = x_nchw.shape
    C_pad = params["c_pad"]
    HW = H * W

    # Channel padding to the sublane tile + free row-major reshape (no transpose).
    if C_pad != C:
        x_nchw_p = jnp.pad(x_nchw, ((0, 0), (0, C_pad - C), (0, 0), (0, 0)))
    else:
        x_nchw_p = x_nchw
    x2d = x_nchw_p.reshape(N * C_pad, HW)

    masks = _make_tap_masks(H, W)

    kern = functools.partial(_fused_double_conv_kernel, H=H, W=W)
    out2d = pl.pallas_call(
        kern,
        out_shape=jax.ShapeDtypeStruct((N * C_pad, HW), x_nchw.dtype),
        grid=(N,),                                   # one image per grid step
        in_specs=[
            pl.BlockSpec((C_pad, HW), lambda n: (n, 0)),           # activations
            pl.BlockSpec((C_pad, 9 * C_pad), lambda n: (0, 0)),    # resident weights
            pl.BlockSpec((C_pad, 9 * C_pad), lambda n: (0, 0)),
            pl.BlockSpec((C_pad, 2), lambda n: (0, 0)),            # resident biases
            pl.BlockSpec((9, HW), lambda n: (0, 0)),               # resident masks
        ],
        out_specs=pl.BlockSpec((C_pad, HW), lambda n: (n, 0)),
        compiler_params=pltpu.CompilerParams(
            dimension_semantics=("parallel",),       # shards images across v7x's 2 TCs
            vmem_limit_bytes=64 * 1024 * 1024),
    )(x2d, params["w1m"], params["w2m"], params["b12"], masks)

    return out2d.reshape(N, C_pad, H, W)[:, :C]


def fold_bn(gamma, beta, mean, var, eps=1e-5):
    scale = gamma / jnp.sqrt(var + eps)
    bias = beta - mean * scale
    return scale, bias


def _to_im2col_layout(w_oihw, scale, c_pad):
    # (O, I, 3, 3) -> (O, 3, 3, I), fold BN scale, pad O and I to c_pad,
    # flatten to (c_pad, 9*c_pad); column = (dy*3 + dx)*c_pad + ci.  bf16 for MXU.
    c = w_oihw.shape[0]
    w = jnp.transpose(w_oihw, (0, 2, 3, 1)) * scale[:, None, None, None]
    w = jnp.pad(w, ((0, c_pad - c), (0, 0), (0, 0), (0, c_pad - c)))
    return w.reshape(c_pad, 9 * c_pad).astype(jnp.bfloat16)


def make_params(key, c):
    c_pad = max(8, ((c + 7) // 8) * 8)
    ks = jax.random.split(key, 10)
    w1_pt = jax.random.normal(ks[0], (c, c, 3, 3), jnp.float32) * 0.1
    w2_pt = jax.random.normal(ks[1], (c, c, 3, 3), jnp.float32) * 0.1

    g1 = 1.0 + 0.1 * jax.random.normal(ks[2], (c,), jnp.float32)
    be1 = 0.1 * jax.random.normal(ks[3], (c,), jnp.float32)
    m1 = 0.1 * jax.random.normal(ks[4], (c,), jnp.float32)
    v1 = jnp.abs(jax.random.normal(ks[5], (c,), jnp.float32)) + 0.5

    g2 = 1.0 + 0.1 * jax.random.normal(ks[6], (c,), jnp.float32)
    be2 = 0.1 * jax.random.normal(ks[7], (c,), jnp.float32)
    m2 = 0.1 * jax.random.normal(ks[8], (c,), jnp.float32)
    v2 = jnp.abs(jax.random.normal(ks[9], (c,), jnp.float32)) + 0.5

    s1, b1 = fold_bn(g1, be1, m1, v1)
    s2, b2 = fold_bn(g2, be2, m2, v2)

    # One-time parameter prep: fold BN scale into the conv weights (exact),
    # lay them out for the in-kernel im2col matmul, pad channels, cast to bf16.
    w1m = _to_im2col_layout(w1_pt, s1, c_pad)
    w2m = _to_im2col_layout(w2_pt, s2, c_pad)
    b12 = jnp.pad(jnp.stack([b1, b2], axis=1), ((0, c_pad - c), (0, 0)))  # (C_pad, 2) f32

    return {
        "w1m": w1m, "w2m": w2m, "b12": b12, "c_pad": c_pad,
        # raw params for the pure-JAX reference
        "w1_pt": w1_pt, "w2_pt": w2_pt,
        "s1": s1, "b1": b1, "s2": s2, "b2": b2,
    }


def reference_forward(x_nchw, params):
    """Pure-JAX f32 reference (lax.conv) for validation."""
    def block(x, w_pt, s, b):
        y = lax.conv_general_dilated(
            x, w_pt, window_strides=(1, 1), padding="SAME",
            dimension_numbers=("NCHW", "OIHW", "NCHW"))
        y = y * s.reshape(1, -1, 1, 1) + b.reshape(1, -1, 1, 1)
        return jnp.where(y >= 0, y, 0.1 * y)

    y = block(x_nchw, params["w1_pt"], params["s1"], params["b1"])
    y = block(y, params["w2_pt"], params["s2"], params["b2"])
    return y


if __name__ == "__main__":
    # `conv(out_c, out_c)` requires in-channels == out-channels.
    N, C, H, W = 2, 4, 16, 16
    key = jax.random.PRNGKey(0)
    kx, kp = jax.random.split(key)
    x = jax.random.normal(kx, (N, C, H, W), jnp.float32)
    params = make_params(kp, C)

    out = conv_block_forward(x, params)
    out = jax.block_until_ready(out)

    ref = reference_forward(x, params)
    assert out.shape == (N, C, H, W)
    err = float(jnp.max(jnp.abs(out - ref)))
    # bf16 MXU operands: tolerance relaxed from 1e-4 (f32) accordingly.
    assert jnp.allclose(out, ref, atol=5e-2, rtol=5e-2), err

    print("KERNEL_OK")
</pallas_src>

<mosaic_0001>
module attributes {stable_mosaic.version = 11 : i64} {
  func.func @_fused_double_conv_kernel(%arg0: i32, %arg1: memref<8x256xf32, #tpu.memory_space<vmem>>, %arg2: memref<8x72xbf16, #tpu.memory_space<vmem>>, %arg3: memref<8x72xbf16, #tpu.memory_space<vmem>>, %arg4: memref<8x2xf32, #tpu.memory_space<vmem>>, %arg5: memref<9x256xf32, #tpu.memory_space<vmem>>, %arg6: memref<8x256xf32, #tpu.memory_space<vmem>>) attributes {dimension_semantics = [#tpu.dimension_semantics<parallel>], iteration_bounds = array<i64: 2>, scalar_prefetch = 0 : i64, scratch_operands = 0 : i64, tpu.core_type = #tpu.core_type<tc>, window_params = [{transform_indices = @transform_0, window_bounds = array<i64: 8, 256>}, {pipeline_mode = #tpu.pipeline_mode<synchronous>, transform_indices = @transform_1, window_bounds = array<i64: 8, 72>}, {pipeline_mode = #tpu.pipeline_mode<synchronous>, transform_indices = @transform_2, window_bounds = array<i64: 8, 72>}, {pipeline_mode = #tpu.pipeline_mode<synchronous>, transform_indices = @transform_3, window_bounds = array<i64: 8, 2>}, {pipeline_mode = #tpu.pipeline_mode<synchronous>, transform_indices = @transform_4, window_bounds = array<i64: 9, 256>}, {transform_indices = @transform_5, window_bounds = array<i64: 8, 256>}]} {
    %c0 = arith.constant 0 : index
    %c0_0 = arith.constant 0 : index
    %0 = vector.load %arg1[%c0, %c0_0] : memref<8x256xf32, #tpu.memory_space<vmem>>, vector<8x256xf32>
    %c0_1 = arith.constant 0 : index
    %c0_2 = arith.constant 0 : index
    %1 = vector.load %arg2[%c0_1, %c0_2] : memref<8x72xbf16, #tpu.memory_space<vmem>>, vector<8x72xbf16>
    %c0_3 = arith.constant 0 : index
    %c0_4 = arith.constant 0 : index
    %2 = vector.load %arg3[%c0_3, %c0_4] : memref<8x72xbf16, #tpu.memory_space<vmem>>, vector<8x72xbf16>
    %c0_5 = arith.constant 0 : index
    %c0_6 = arith.constant 0 : index
    %3 = vector.load %arg4[%c0_5, %c0_6] : memref<8x2xf32, #tpu.memory_space<vmem>>, vector<8x2xf32>
    %c0_7 = arith.constant 0 : index
    %c0_8 = arith.constant 0 : index
    %4 = vector.load %arg5[%c0_7, %c0_8] : memref<9x256xf32, #tpu.memory_space<vmem>>, vector<9x256xf32>
    %5 = vector.extract_strided_slice %3 {offsets = [0, 0], sizes = [8, 1], strides = [1, 1]} : vector<8x2xf32> to vector<8x1xf32>
    %c17_i32 = arith.constant 17 : i32
    %6 = tpu.dynamic_rotate %0 by %c17_i32 dim 1 : vector<8x256xf32>, i32 -> vector<8x256xf32>
    %7 = vector.extract_strided_slice %4 {offsets = [0, 0], sizes = [1, 256], strides = [1, 1]} : vector<9x256xf32> to vector<1x256xf32>
    %8 = vector.broadcast %7 : vector<1x256xf32> to vector<8x256xf32>
    %9 = arith.mulf %6, %8 : vector<8x256xf32>
    %c16_i32 = arith.constant 16 : i32
    %10 = tpu.dynamic_rotate %0 by %c16_i32 dim 1 : vector<8x256xf32>, i32 -> vector<8x256xf32>
    %11 = vector.extract_strided_slice %4 {offsets = [1, 0], sizes = [1, 256], strides = [1, 1]} : vector<9x256xf32> to vector<1x256xf32>
    %12 = vector.broadcast %11 : vector<1x256xf32> to vector<8x256xf32>
    %13 = arith.mulf %10, %12 : vector<8x256xf32>
    %c15_i32 = arith.constant 15 : i32
    %14 = tpu.dynamic_rotate %0 by %c15_i32 dim 1 : vector<8x256xf32>, i32 -> vector<8x256xf32>
    %15 = vector.extract_strided_slice %4 {offsets = [2, 0], sizes = [1, 256], strides = [1, 1]} : vector<9x256xf32> to vector<1x256xf32>
    %16 = vector.broadcast %15 : vector<1x256xf32> to vector<8x256xf32>
    %17 = arith.mulf %14, %16 : vector<8x256xf32>
    %c1_i32 = arith.constant 1 : i32
    %18 = tpu.dynamic_rotate %0 by %c1_i32 dim 1 : vector<8x256xf32>, i32 -> vector<8x256xf32>
    %19 = vector.extract_strided_slice %4 {offsets = [3, 0], sizes = [1, 256], strides = [1, 1]} : vector<9x256xf32> to vector<1x256xf32>
    %20 = vector.broadcast %19 : vector<1x256xf32> to vector<8x256xf32>
    %21 = arith.mulf %18, %20 : vector<8x256xf32>
    %c255_i32 = arith.constant 255 : i32
    %22 = tpu.dynamic_rotate %0 by %c255_i32 dim 1 : vector<8x256xf32>, i32 -> vector<8x256xf32>
    %23 = vector.extract_strided_slice %4 {offsets = [5, 0], sizes = [1, 256], strides = [1, 1]} : vector<9x256xf32> to vector<1x256xf32>
    %24 = vector.broadcast %23 : vector<1x256xf32> to vector<8x256xf32>
    %25 = arith.mulf %22, %24 : vector<8x256xf32>
    %c241_i32 = arith.constant 241 : i32
    %26 = tpu.dynamic_rotate %0 by %c241_i32 dim 1 : vector<8x256xf32>, i32 -> vector<8x256xf32>
    %27 = vector.extract_strided_slice %4 {offsets = [6, 0], sizes = [1, 256], strides = [1, 1]} : vector<9x256xf32> to vector<1x256xf32>
    %28 = vector.broadcast %27 : vector<1x256xf32> to vector<8x256xf32>
    %29 = arith.mulf %26, %28 : vector<8x256xf32>
    %c240_i32 = arith.constant 240 : i32
    %30 = tpu.dynamic_rotate %0 by %c240_i32 dim 1 : vector<8x256xf32>, i32 -> vector<8x256xf32>
    %31 = vector.extract_strided_slice %4 {offsets = [7, 0], sizes = [1, 256], strides = [1, 1]} : vector<9x256xf32> to vector<1x256xf32>
    %32 = vector.broadcast %31 : vector<1x256xf32> to vector<8x256xf32>
    %33 = arith.mulf %30, %32 : vector<8x256xf32>
    %c239_i32 = arith.constant 239 : i32
    %34 = tpu.dynamic_rotate %0 by %c239_i32 dim 1 : vector<8x256xf32>, i32 -> vector<8x256xf32>
    %35 = vector.extract_strided_slice %4 {offsets = [8, 0], sizes = [1, 256], strides = [1, 1]} : vector<9x256xf32> to vector<1x256xf32>
    %36 = vector.broadcast %35 : vector<1x256xf32> to vector<8x256xf32>
    %37 = arith.mulf %34, %36 : vector<8x256xf32>
    %38 = tpu.concatenate %9, %13, %17, %21, %0, %25, %29, %33, %37 in 0 : vector<8x256xf32>, vector<8x256xf32>, vector<8x256xf32>, vector<8x256xf32>, vector<8x256xf32>, vector<8x256xf32>, vector<8x256xf32>, vector<8x256xf32>, vector<8x256xf32> -> vector<72x256xf32>
    %39 = arith.truncf %38 : vector<72x256xf32> to vector<72x256xbf16>
    %cst = arith.constant dense<0.000000e+00> : vector<8x256xf32>
    %40 = tpu.matmul %1, %39, %cst {dimension_numbers = #tpu.dot_dimension_numbers<[1], [0], [0], [1], [0, 0, 1, 1], [], []>} : vector<8x72xbf16>, vector<72x256xbf16>, vector<8x256xf32> -> vector<8x256xf32>
    %41 = vector.broadcast %5 : vector<8x1xf32> to vector<8x256xf32>
    %42 = arith.addf %40, %41 : vector<8x256xf32>
    %cst_9 = arith.constant 1.000000e-01 : f32
    %43 = vector.broadcast %cst_9 : f32 to vector<8x256xf32>
    %44 = arith.mulf %43, %42 : vector<8x256xf32>
    %45 = arith.maximumf %42, %44 : vector<8x256xf32>
    %46 = vector.extract_strided_slice %3 {offsets = [0, 1], sizes = [8, 1], strides = [1, 1]} : vector<8x2xf32> to vector<8x1xf32>
    %c17_i32_10 = arith.constant 17 : i32
    %47 = tpu.dynamic_rotate %45 by %c17_i32_10 dim 1 : vector<8x256xf32>, i32 -> vector<8x256xf32>
    %48 = vector.extract_strided_slice %4 {offsets = [0, 0], sizes = [1, 256], strides = [1, 1]} : vector<9x256xf32> to vector<1x256xf32>
    %49 = vector.broadcast %48 : vector<1x256xf32> to vector<8x256xf32>
    %50 = arith.mulf %47, %49 : vector<8x256xf32>
    %c16_i32_11 = arith.constant 16 : i32
    %51 = tpu.dynamic_rotate %45 by %c16_i32_11 dim 1 : vector<8x256xf32>, i32 -> vector<8x256xf32>
    %52 = vector.extract_strided_slice %4 {offsets = [1, 0], sizes = [1, 256], strides = [1, 1]} : vector<9x256xf32> to vector<1x256xf32>
    %53 = vector.broadcast %52 : vector<1x256xf32> to vector<8x256xf32>
    %54 = arith.mulf %51, %53 : vector<8x256xf32>
    %c15_i32_12 = arith.constant 15 : i32
    %55 = tpu.dynamic_rotate %45 by %c15_i32_12 dim 1 : vector<8x256xf32>, i32 -> vector<8x256xf32>
    %56 = vector.extract_strided_slice %4 {offsets = [2, 0], sizes = [1, 256], strides = [1, 1]} : vector<9x256xf32> to vector<1x256xf32>
    %57 = vector.broadcast %56 : vector<1x256xf32> to vector<8x256xf32>
    %58 = arith.mulf %55, %57 : vector<8x256xf32>
    %c1_i32_13 = arith.constant 1 : i32
    %59 = tpu.dynamic_rotate %45 by %c1_i32_13 dim 1 : vector<8x256xf32>, i32 -> vector<8x256xf32>
    %60 = vector.extract_strided_slice %4 {offsets = [3, 0], sizes = [1, 256], strides = [1, 1]} : vector<9x256xf32> to vector<1x256xf32>
    %61 = vector.broadcast %60 : vector<1x256xf32> to vector<8x256xf32>
    %62 = arith.mulf %59, %61 : vector<8x256xf32>
    %c255_i32_14 = arith.constant 255 : i32
    %63 = tpu.dynamic_rotate %45 by %c255_i32_14 dim 1 : vector<8x256xf32>, i32 -> vector<8x256xf32>
    %64 = vector.extract_strided_slice %4 {offsets = [5, 0], sizes = [1, 256], strides = [1, 1]} : vector<9x256xf32> to vector<1x256xf32>
    %65 = vector.broadcast %64 : vector<1x256xf32> to vector<8x256xf32>
    %66 = arith.mulf %63, %65 : vector<8x256xf32>
    %c241_i32_15 = arith.constant 241 : i32
    %67 = tpu.dynamic_rotate %45 by %c241_i32_15 dim 1 : vector<8x256xf32>, i32 -> vector<8x256xf32>
    %68 = vector.extract_strided_slice %4 {offsets = [6, 0], sizes = [1, 256], strides = [1, 1]} : vector<9x256xf32> to vector<1x256xf32>
    %69 = vector.broadcast %68 : vector<1x256xf32> to vector<8x256xf32>
    %70 = arith.mulf %67, %69 : vector<8x256xf32>
    %c240_i32_16 = arith.constant 240 : i32
    %71 = tpu.dynamic_rotate %45 by %c240_i32_16 dim 1 : vector<8x256xf32>, i32 -> vector<8x256xf32>
    %72 = vector.extract_strided_slice %4 {offsets = [7, 0], sizes = [1, 256], strides = [1, 1]} : vector<9x256xf32> to vector<1x256xf32>
    %73 = vector.broadcast %72 : vector<1x256xf32> to vector<8x256xf32>
    %74 = arith.mulf %71, %73 : vector<8x256xf32>
    %c239_i32_17 = arith.constant 239 : i32
    %75 = tpu.dynamic_rotate %45 by %c239_i32_17 dim 1 : vector<8x256xf32>, i32 -> vector<8x256xf32>
    %76 = vector.extract_strided_slice %4 {offsets = [8, 0], sizes = [1, 256], strides = [1, 1]} : vector<9x256xf32> to vector<1x256xf32>
    %77 = vector.broadcast %76 : vector<1x256xf32> to vector<8x256xf32>
    %78 = arith.mulf %75, %77 : vector<8x256xf32>
    %79 = tpu.concatenate %50, %54, %58, %62, %45, %66, %70, %74, %78 in 0 : vector<8x256xf32>, vector<8x256xf32>, vector<8x256xf32>, vector<8x256xf32>, vector<8x256xf32>, vector<8x256xf32>, vector<8x256xf32>, vector<8x256xf32>, vector<8x256xf32> -> vector<72x256xf32>
    %80 = arith.truncf %79 : vector<72x256xf32> to vector<72x256xbf16>
    %cst_18 = arith.constant dense<0.000000e+00> : vector<8x256xf32>
    %81 = tpu.matmul %2, %80, %cst_18 {dimension_numbers = #tpu.dot_dimension_numbers<[1], [0], [0], [1], [0, 0, 1, 1], [], []>} : vector<8x72xbf16>, vector<72x256xbf16>, vector<8x256xf32> -> vector<8x256xf32>
    %82 = vector.broadcast %46 : vector<8x1xf32> to vector<8x256xf32>
    %83 = arith.addf %81, %82 : vector<8x256xf32>
    %cst_19 = arith.constant 1.000000e-01 : f32
    %84 = vector.broadcast %cst_19 : f32 to vector<8x256xf32>
    %85 = arith.mulf %84, %83 : vector<8x256xf32>
    %86 = arith.maximumf %83, %85 : vector<8x256xf32>
    %c0_20 = arith.constant 0 : index
    %c0_21 = arith.constant 0 : index
    %87 = vector.load %arg6[%c0_20, %c0_21] : memref<8x256xf32, #tpu.memory_space<vmem>>, vector<8x256xf32>
    tpu.vector_store %arg6[%c0_20, %c0_21], %86 {strides = array<i32>} : memref<8x256xf32, #tpu.memory_space<vmem>>, vector<8x256xf32>,
    return
  }
  func.func @transform_0(%arg0: i32) -> (i32, i32) {
    %c0_i32 = arith.constant 0 : i32
    %c0_i32_0 = arith.constant 0 : i32
    return %arg0, %c0_i32 : i32, i32
  }
  func.func @transform_1(%arg0: i32) -> (i32, i32) {
    %c0_i32 = arith.constant 0 : i32
    %c0_i32_0 = arith.constant 0 : i32
    %c0_i32_1 = arith.constant 0 : i32
    return %c0_i32, %c0_i32_0 : i32, i32
  }
  func.func @transform_2(%arg0: i32) -> (i32, i32) {
    %c0_i32 = arith.constant 0 : i32
    %c0_i32_0 = arith.constant 0 : i32
    %c0_i32_1 = arith.constant 0 : i32
    return %c0_i32, %c0_i32_0 : i32, i32
  }
  func.func @transform_3(%arg0: i32) -> (i32, i32) {
    %c0_i32 = arith.constant 0 : i32
    %c0_i32_0 = arith.constant 0 : i32
    %c0_i32_1 = arith.constant 0 : i32
    return %c0_i32, %c0_i32_0 : i32, i32
  }
  func.func @transform_4(%arg0: i32) -> (i32, i32) {
    %c0_i32 = arith.constant 0 : i32
    %c0_i32_0 = arith.constant 0 : i32
    %c0_i32_1 = arith.constant 0 : i32
    return %c0_i32, %c0_i32_0 : i32, i32
  }
  func.func @transform_5(%arg0: i32) -> (i32, i32) {
    %c0_i32 = arith.constant 0 : i32
    %c0_i32_0 = arith.constant 0 : i32
    return %arg0, %c0_i32 : i32, i32
  }
}

</mosaic_0001>

<llo_original>
// kernel: tpu_custom_call.1
$region0: #{tpu_custom_call.1}
  #allocation0 [shape = 'u32[]', space=smem, size = 0x4, offset = 0x4, fixed_abs, tag = 'smem constant byte address 0x4 - core index']
  #allocation1 [shape = 'u32[144,128]{1,0:T(1,128)}', space=vmem, size = 0x12000, scoped, tag = 'internal scratch']
  %s0 = inlined_call_operand.hbm [shape: f32[16,256], index: 0, kind: input, shape index: {}]
  %s1 = inlined_call_operand.vmem [shape: bf16[8,72], index: 1, kind: input, shape index: {}]
  %s2 = inlined_call_operand.vmem [shape: bf16[8,72], index: 2, kind: input, shape index: {}]
  %s3 = inlined_call_operand.vmem [shape: f32[8,2], index: 3, kind: input, shape index: {}]
  %s4 = inlined_call_operand.hbm [shape: f32[9,256], index: 4, kind: input, shape index: {}]
  %s5 = inlined_call_operand.hbm [shape: f32[16,256], index: 5, kind: output, shape index: {}]
  %s6 = sld [smem:[#allocation0]]
  $region61: #{tpu_custom_call.1} parent=0
    _
  %s8 = ssub.s32 1, %s6
  %s9 = scalar_select 0, %s8, %s6
  $region1: #{tpu_custom_call.1} parent=0
    #allocation2 [shape = 'u8[16384]{0}', space=vmem, size = 0x4000, scoped, tag = 'input window, operand 0']
    #allocation3 [shape = 's32[2]{0}', space=sflag, size = 0x8, scoped, tag = 'scoped memory for tpu_custom_call.1']
    #allocation4 [shape = 's32[2]{0}', space=sflag, size = 0x8, scoped, tag = 'scoped memory for tpu_custom_call.1']
    #allocation5 [shape = 'u8[16384]{0}', space=vmem, size = 0x4000, scoped, tag = 'input window, operand 4, single buffered']
    #allocation6 [shape = 's32[1]{0}', space=sflag, size = 0x4, scoped, tag = 'scoped memory for tpu_custom_call.1']
    #allocation7 [shape = 'u8[16384]{0}', space=vmem, size = 0x4000, scoped, tag = 'output window, operand 0']
    %10 = vsyncpa [#allocation3], 0
    %s11 = scalar_lea.sflag [#allocation3], 1
    %12 = vsyncpa %s11, 0
    %13 = vsyncpa [#allocation6], 0
    %14 = vsyncpa [#allocation4], 0
    %s15 = scalar_lea.sflag [#allocation4], 1
    %16 = vsyncpa %s15, 0
    loop: start=0, step=1, limit=4
    $region2: #{tpu_custom_call.1} parent=1 // loop_pre_header
      _
    $region3: #{tpu_custom_call.1} parent=1 // loop_header
      %s18 = sphi 0, %s22
      %p19 = scmp.ge.s32.totalorder %s18, 4
      %s28 = sphi 0, %s30
      %s31 = sphi 0, %s28
      %s32 = sphi 0, %s31
      %s48 = sphi 0, %s32
      %s52 = sphi 0, %s52
      %s54 = sphi 0, %s52
      %s55 = sphi 0, %s54
      %s69 = sphi 0, %s55
      %s73 = sphi 0, %s73
      %s75 = sphi 0, %s73
      %s76 = sphi 0, %s75
      %s90 = sphi 0, %s76
      %s94 = sphi 0, %s94
      %s96 = sphi 0, %s94
      %s97 = sphi 0, %s96
      %s111 = sphi 0, %s97
      %s115 = sphi 0, %s115
      %s117 = sphi 0, %s115
      %s118 = sphi 0, %s117
      %s132 = sphi 0, %s118
      %s138 = sphi 0, %s140
      %s141 = sphi 0, %s138
      %s142 = sphi 0, %s141
      %s158 = sphi 0, %s142
    $region4: #{tpu_custom_call.1} parent=1 // loop_header_branch
      %21 = sbr.rel (%p19) target = $region8
    $region5: #{tpu_custom_call.1} parent=1 // loop_body
      %s23 = ssub.s32 %s18, 1
      %s24 = ssub.s32 %s18, 2
      %s25 = sadd.s32 %s18, 1
      %s26 = ssub.s32 %s18, %s25
      %p27 = scmp.eq.s32.totalorder %s26, 0
      %s29 = sadd.s32 %s28, 1
      %s30 = scalar_select %p27, %s28, %s29
      %p33 = pneg %p27
      %p34 = scmp.eq.s32.totalorder %s18, 1
      %p35 = por %p33, %p34
      %p36 = scmp.ne.s32.totalorder %s28, %s31
      %p37 = scmp.eq.s32.totalorder %s18, 0
      %p38 = por %p36, %p37
      %p39 = scmp.ne.s32.totalorder %s28, %s31
      %p40 = scmp.eq.s32.totalorder %s23, 1
      %p41 = por %p39, %p40
      %p42 = scmp.ne.s32.totalorder %s31, %s32
      %p43 = scmp.eq.s32.totalorder %s23, 0
      %p44 = por %p42, %p43
      %p45 = scmp.ne.s32.totalorder %s31, %s32
      %p46 = scmp.eq.s32.totalorder %s24, 1
      %p47 = por %p45, %p46
      %p49 = scmp.ne.s32.totalorder %s32, %s48
      %p50 = scmp.eq.s32.totalorder %s24, 0
      %p51 = por %p49, %p50
      %s53 = sadd.s32 %s52, 1
      %p56 = scmp.eq.s32.totalorder %s18, 1
      %p57 = scmp.ne.s32.totalorder %s52, %s54
      %p58 = scmp.eq.s32.totalorder %s18, 0
      %p59 = por %p57, %p58
      %p60 = scmp.ne.s32.totalorder %s52, %s54
      %p61 = scmp.eq.s32.totalorder %s23, 1
      %p62 = por %p60, %p61
      %p63 = scmp.ne.s32.totalorder %s54, %s55
      %p64 = scmp.eq.s32.totalorder %s23, 0
      %p65 = por %p63, %p64
      %p66 = scmp.ne.s32.totalorder %s54, %s55
      %p67 = scmp.eq.s32.totalorder %s24, 1
      %p68 = por %p66, %p67
      %p70 = scmp.ne.s32.totalorder %s55, %s69
      %p71 = scmp.eq.s32.totalorder %s24, 0
      %p72 = por %p70, %p71
      %s74 = sadd.s32 %s73, 1
      %p77 = scmp.eq.s32.totalorder %s18, 1
      %p78 = scmp.ne.s32.totalorder %s73, %s75
      %p79 = scmp.eq.s32.totalorder %s18, 0
      %p80 = por %p78, %p79
      %p81 = scmp.ne.s32.totalorder %s73, %s75
      %p82 = scmp.eq.s32.totalorder %s23, 1
      %p83 = por %p81, %p82
      %p84 = scmp.ne.s32.totalorder %s75, %s76
      %p85 = scmp.eq.s32.totalorder %s23, 0
      %p86 = por %p84, %p85
      %p87 = scmp.ne.s32.totalorder %s75, %s76
      %p88 = scmp.eq.s32.totalorder %s24, 1
      %p89 = por %p87, %p88
      %p91 = scmp.ne.s32.totalorder %s76, %s90
      %p92 = scmp.eq.s32.totalorder %s24, 0
      %p93 = por %p91, %p92
      %s95 = sadd.s32 %s94, 1
      %p98 = scmp.eq.s32.totalorder %s18, 1
      %p99 = scmp.ne.s32.totalorder %s94, %s96
      %p100 = scmp.eq.s32.totalorder %s18, 0
      %p101 = por %p99, %p100
      %p102 = scmp.ne.s32.totalorder %s94, %s96
      %p103 = scmp.eq.s32.totalorder %s23, 1
      %p104 = por %p102, %p103
      %p105 = scmp.ne.s32.totalorder %s96, %s97
      %p106 = scmp.eq.s32.totalorder %s23, 0
      %p107 = por %p105, %p106
      %p108 = scmp.ne.s32.totalorder %s96, %s97
      %p109 = scmp.eq.s32.totalorder %s24, 1
      %p110 = por %p108, %p109
      %p112 = scmp.ne.s32.totalorder %s97, %s111
      %p113 = scmp.eq.s32.totalorder %s24, 0
      %p114 = por %p112, %p113
      %s116 = sadd.s32 %s115, 1
      %p119 = scmp.eq.s32.totalorder %s18, 1
      %p120 = scmp.ne.s32.totalorder %s115, %s117
      %p121 = scmp.eq.s32.totalorder %s18, 0
      %p122 = por %p120, %p121
      %p123 = scmp.ne.s32.totalorder %s115, %s117
      %p124 = scmp.eq.s32.totalorder %s23, 1
      %p125 = por %p123, %p124
      %p126 = scmp.ne.s32.totalorder %s117, %s118
      %p127 = scmp.eq.s32.totalorder %s23, 0
      %p128 = por %p126, %p127
      %p129 = scmp.ne.s32.totalorder %s117, %s118
      %p130 = scmp.eq.s32.totalorder %s24, 1
      %p131 = por %p129, %p130
      %p133 = scmp.ne.s32.totalorder %s118, %s132
      %p134 = scmp.eq.s32.totalorder %s24, 0
      %p135 = por %p133, %p134
      %s136 = ssub.s32 %s18, %s25
      %p137 = scmp.eq.s32.totalorder %s136, 0
      %s139 = sadd.s32 %s138, 1
      %s140 = scalar_select %p137, %s138, %s139
      %p143 = pneg %p137
      %p144 = scmp.eq.s32.totalorder %s18, 1
      %p145 = por %p143, %p144
      %p146 = scmp.ne.s32.totalorder %s138, %s141
      %p147 = scmp.eq.s32.totalorder %s18, 0
      %p148 = por %p146, %p147
      %p149 = scmp.ne.s32.totalorder %s138, %s141
      %p150 = scmp.eq.s32.totalorder %s23, 1
      %p151 = por %p149, %p150
      %p152 = scmp.ne.s32.totalorder %s141, %s142
      %p153 = scmp.eq.s32.totalorder %s23, 0
      %p154 = por %p152, %p153
      %p155 = scmp.ne.s32.totalorder %s141, %s142
      %p156 = scmp.eq.s32.totalorder %s24, 1
      %p157 = por %p155, %p156
      %p159 = scmp.ne.s32.totalorder %s142, %s158
      %p160 = scmp.eq.s32.totalorder %s24, 0
      %p161 = por %p159, %p160
      %p162 = scmp.le.s32.totalorder 1, %s18
      %p163 = scmp.lt.s32.totalorder %s18, 3
      %p164 = pnand %p162, %p163
      %p165 = pneg %p164
      // Predicated region
      $region9: #{tpu_custom_call.1} parent=5 // pred_check
        _
      $region10: #{tpu_custom_call.1} parent=5 // pred_check_branch
        %167 = sbr.rel (%p164) target = $region12
      $region11: #{tpu_custom_call.1} parent=5 // pred_region
        %s168 = ssub.s32 %s18, 1
        // Predicated region
        $region13: #{tpu_custom_call.1} parent=11 // pred_check
          %p169 = pneg %p65
        $region14: #{tpu_custom_call.1} parent=11 // pred_check_branch
          %171 = sbr.rel (%p169) target = $region16
        $region15: #{tpu_custom_call.1} parent=11 // pred_region
          _
        $region16: #{tpu_custom_call.1} parent=11 // pred_fallthru
          _
        // Predicated region
        $region17: #{tpu_custom_call.1} parent=11 // pred_check
          %p172 = pneg %p86
        $region18: #{tpu_custom_call.1} parent=11 // pred_check_branch
          %174 = sbr.rel (%p172) target = $region20
        $region19: #{tpu_custom_call.1} parent=11 // pred_region
          _
        $region20: #{tpu_custom_call.1} parent=11 // pred_fallthru
          _
        // Predicated region
        $region21: #{tpu_custom_call.1} parent=11 // pred_check
          %p175 = pneg %p107
        $region22: #{tpu_custom_call.1} parent=11 // pred_check_branch
          %177 = sbr.rel (%p175) target = $region24
        $region23: #{tpu_custom_call.1} parent=11 // pred_region
          _
        $region24: #{tpu_custom_call.1} parent=11 // pred_fallthru
          _
        // Predicated region
        $region25: #{tpu_custom_call.1} parent=11 // pred_check
          %p178 = pneg %p128
        $region26: #{tpu_custom_call.1} parent=11 // pred_check_branch
          %180 = sbr.rel (%p178) target = $region28
        $region27: #{tpu_custom_call.1} parent=11 // pred_region
          %s182 = ssub.s32 512, 512
          %183 = vsyncadd [#allocation6], %s182
          %s184 = sshll.u32 [#allocation5], 4
          %s185 = int_to_ptr.vmem [resolvable:$true] %s184
          %190 = dma.hbm_to_vmem [thread:$0]  %s4, 512, %s185, [#allocation6], 256, 256, 16
        $region28: #{tpu_custom_call.1} parent=11 // pred_fallthru
          _
      $region12: #{tpu_custom_call.1} parent=5 // pred_fallthru
        _
      %p191 = scmp.lt.s32.totalorder %s18, 2
      // Predicated region
      $region29: #{tpu_custom_call.1} parent=5 // pred_check
        %p192 = pneg %p191
      $region30: #{tpu_custom_call.1} parent=5 // pred_check_branch
        %194 = sbr.rel (%p192) target = $region32
      $region31: #{tpu_custom_call.1} parent=5 // pred_region
        // Predicated region
        $region33: #{tpu_custom_call.1} parent=31 // pred_check
          %p195 = pneg %p38
        $region34: #{tpu_custom_call.1} parent=31 // pred_check_branch
          %197 = sbr.rel (%p195) target = $region36
        $region35: #{tpu_custom_call.1} parent=31 // pred_region
          %s198 = sand.u32 %s28, 1
          %s199 = scalar_lea.sflag [#allocation3], %s198
          %s200 = sand.u32 %s28, 1
          %s201 = smul.addr %s200, 16
          %s202 = scalar_lea.vmem [#allocation2], %s201
          %s204 = ssub.s32 256, 256
          %205 = vsyncadd %s199, %s204
          %s206 = smul.addr %s18, 2
          %s207 = smul.addr %s206, 128
          %s208 = scalar_lea.hbm %s0, %s207
          %s210 = sshll.u32 %s202, 4
          %s211 = int_to_ptr.vmem [resolvable:$true] %s210
          %213 = dma.hbm_to_vmem [thread:$0]  %s208, 256, %s211, %s199
        $region36: #{tpu_custom_call.1} parent=31 // pred_fallthru
          _
      $region32: #{tpu_custom_call.1} parent=5 // pred_fallthru
        _
      %p214 = scmp.le.s32.totalorder 1, %s18
      %p215 = scmp.lt.s32.totalorder %s18, 3
      %p216 = pnand %p214, %p215
      %p217 = pneg %p216
      // Predicated region
      $region37: #{tpu_custom_call.1} parent=5 // pred_check
        _
      $region38: #{tpu_custom_call.1} parent=5 // pred_check_branch
        %219 = sbr.rel (%p216) target = $region40
      $region39: #{tpu_custom_call.1} parent=5 // pred_region
        %s220 = ssub.s32 %s18, 1
        %s221 = sand.u32 %s31, 1
        %s222 = scalar_lea.sflag [#allocation3], %s221
        %s223 = sand.u32 %s31, 1
        %s224 = smul.addr %s223, 16
        %s225 = scalar_lea.vmem [#allocation2], %s224
        // Predicated region
        $region41: #{tpu_custom_call.1} parent=39 // pred_check
          %p226 = pneg %p44
        $region42: #{tpu_custom_call.1} parent=39 // pred_check_branch
          %228 = sbr.rel (%p226) target = $region44
        $region43: #{tpu_custom_call.1} parent=39 // pred_region
          %229 = dma.done %s222, 256
        $region44: #{tpu_custom_call.1} parent=39 // pred_fallthru
          _
        // Predicated region
        $region45: #{tpu_custom_call.1} parent=39 // pred_check
          %p230 = pneg %p128
        $region46: #{tpu_custom_call.1} parent=39 // pred_check_branch
          %232 = sbr.rel (%p230) target = $region48
        $region47: #{tpu_custom_call.1} parent=39 // pred_region
          %233 = dma.done [#allocation6], 512
        $region48: #{tpu_custom_call.1} parent=39 // pred_fallthru
          _
        %s234 = sand.u32 %s31, 1
        %s235 = scalar_lea.sflag [#allocation3], %s234
        %s236 = sand.u32 %s31, 1
        %s237 = smul.addr %s236, 16
        %s238 = scalar_lea.vmem [#allocation2], %s237
        %p239 = pneg %p44
        %p240 = pneg %p41
        %p241 = pneg %p65
        %p242 = pneg %p62
        %p243 = pneg %p86
        %p244 = pneg %p83
        %p245 = pneg %p107
        %p246 = pneg %p104
        %p247 = pneg %p128
        %p248 = pneg %p125
        %p249 = pneg %p154
        %p250 = pneg %p151
        %s251 = sand.u32 %s141, 1
        %s252 = scalar_lea.sflag [#allocation4], %s251
        %s253 = sand.u32 %s141, 1
        %s254 = smul.addr %s253, 16
        %s255 = scalar_lea.vmem [#allocation7], %s254
        %v257 = vld [vmem:[%s225] sm:$0xff]
        %v258 = vld [vmem:[%s225 + $0x8] sm:$0xff]
        %v259 = vld [vmem:[%s1] sm:$0xf]
        %v260 = vld [vmem:[%s2] sm:$0xf]
        %v261 = vld [vmem:[%s3] sm:$0xff]
        %v262 = vld [vmem:[#allocation5] sm:$0xff]
        %v263 = vld [vmem:[#allocation5 + $0x8] sm:$0xff]
        %v264 = vld [vmem:[#allocation5 + $0x10] sm:$0x1]
        %v265 = vld [vmem:[#allocation5 + $0x18] sm:$0x1]
        %266 = vrot.lane.b32.xlu0 %v257, 17
        %v267 = vpop.permute.xlu0 %266
        %268 = vrot.lane.b32.xlu0 %v258, 17
        %v269 = vpop.permute.xlu0 %268
        %v270 = vlaneseq
        %v271 = vand.u32 %v270, 127
        %vm272 = vcmp.lt.s32.totalorder %v271, 17
        %v273 = vsel %vm272, %v267, %v269
        %v274 = vsel %vm272, %v269, %v267
        %v275 = vlaneseq
        %v276 = vshrl.u32 %v275, 7
        %v277 = vsub.s32 0, %v276
        %v278 = vrot.slane %v262, %v277
        %v279 = vlaneseq
        %v280 = vshrl.u32 %v279, 7
        %v281 = vsub.s32 0, %v280
        %v282 = vrot.slane %v263, %v281
        %v283 = vmul.f32 %v274, %v278
        %v284 = vmul.f32 %v273, %v282
        %285 = vrot.lane.b32.xlu0 %v257, 16
        %v286 = vpop.permute.xlu0 %285
        %287 = vrot.lane.b32.xlu0 %v258, 16
        %v288 = vpop.permute.xlu0 %287
        %vm289 = vcmp.lt.s32.totalorder %v271, 16
        %v290 = vsel %vm289, %v286, %v288
        %v291 = vsel %vm289, %v288, %v286
        %v292 = vlaneseq
        %v293 = vshrl.u32 %v292, 7
        %v294 = vsub.s32 1, %v293
        %v295 = vrot.slane %v262, %v294
        %v296 = vlaneseq
        %v297 = vshrl.u32 %v296, 7
        %v298 = vsub.s32 1, %v297
        %v299 = vrot.slane %v263, %v298
        %v300 = vmul.f32 %v291, %v295
        %v301 = vmul.f32 %v290, %v299
        %302 = vrot.lane.b32.xlu0 %v257, 15
        %v303 = vpop.permute.xlu0 %302
        %304 = vrot.lane.b32.xlu0 %v258, 15
        %v305 = vpop.permute.xlu0 %304
        %vm306 = vcmp.lt.s32.totalorder %v271, 15
        %v307 = vsel %vm306, %v303, %v305
        %v308 = vsel %vm306, %v305, %v303
        %v309 = vlaneseq
        %v310 = vshrl.u32 %v309, 7
        %v311 = vsub.s32 2, %v310
        %v312 = vrot.slane %v262, %v311
        %v313 = vlaneseq
        %v314 = vshrl.u32 %v313, 7
        %v315 = vsub.s32 2, %v314
        %v316 = vrot.slane %v263, %v315
        %v317 = vmul.f32 %v308, %v312
        %v318 = vmul.f32 %v307, %v316
        %319 = vrot.lane.b32.xlu0 %v257, 1
        %v320 = vpop.permute.xlu0 %319
        %321 = vrot.lane.b32.xlu0 %v258, 1
        %v322 = vpop.permute.xlu0 %321
        %vm323 = vcmp.lt.s32.totalorder %v271, 1
        %v324 = vsel %vm323, %v320, %v322
        %v325 = vsel %vm323, %v322, %v320
        %v326 = vlaneseq
        %v327 = vshrl.u32 %v326, 7
        %v328 = vsub.s32 3, %v327
        %v329 = vrot.slane %v262, %v328
        %v330 = vlaneseq
        %v331 = vshrl.u32 %v330, 7
        %v332 = vsub.s32 3, %v331
        %v333 = vrot.slane %v263, %v332
        %v334 = vmul.f32 %v325, %v329
        %v335 = vmul.f32 %v324, %v333
        %336 = vrot.lane.b32.xlu0 %v257, 127
        %v337 = vpop.permute.xlu0 %336
        %338 = vrot.lane.b32.xlu0 %v258, 127
        %v339 = vpop.permute.xlu0 %338
        %vm340 = vcmp.lt.s32.totalorder %v271, 127
        %v341 = vsel %vm340, %v337, %v339
        %v342 = vsel %vm340, %v339, %v337
        %v343 = vlaneseq
        %v344 = vshrl.u32 %v343, 7
        %v345 = vsub.s32 5, %v344
        %v346 = vrot.slane %v262, %v345
        %v347 = vlaneseq
        %v348 = vshrl.u32 %v347, 7
        %v349 = vsub.s32 5, %v348
        %v350 = vrot.slane %v263, %v349
        %v351 = vmul.f32 %v341, %v346
        %v352 = vmul.f32 %v342, %v350
        %353 = vrot.lane.b32.xlu0 %v257, 113
        %v354 = vpop.permute.xlu0 %353
        %355 = vrot.lane.b32.xlu0 %v258, 113
        %v356 = vpop.permute.xlu0 %355
        %vm357 = vcmp.lt.s32.totalorder %v271, 113
        %v358 = vsel %vm357, %v354, %v356
        %v359 = vsel %vm357, %v356, %v354
        %v360 = vlaneseq
        %v361 = vshrl.u32 %v360, 7
        %v362 = vsub.s32 6, %v361
        %v363 = vrot.slane %v262, %v362
        %v364 = vlaneseq
        %v365 = vshrl.u32 %v364, 7
        %v366 = vsub.s32 6, %v365
        %v367 = vrot.slane %v263, %v366
        %v368 = vmul.f32 %v358, %v363
        %v369 = vmul.f32 %v359, %v367
        %370 = vrot.lane.b32.xlu0 %v257, 112
        %v371 = vpop.permute.xlu0 %370
        %372 = vrot.lane.b32.xlu0 %v258, 112
        %v373 = vpop.permute.xlu0 %372
        %vm374 = vcmp.lt.s32.totalorder %v271, 112
        %v375 = vsel %vm374, %v371, %v373
        %v376 = vsel %vm374, %v373, %v371
        %v377 = vlaneseq
        %v378 = vshrl.u32 %v377, 7
        %v379 = vsub.s32 7, %v378
        %v380 = vrot.slane %v262, %v379
        %v381 = vlaneseq
        %v382 = vshrl.u32 %v381, 7
        %v383 = vsub.s32 7, %v382
        %v384 = vrot.slane %v263, %v383
        %v385 = vmul.f32 %v375, %v380
        %v386 = vmul.f32 %v376, %v384
        %387 = vrot.lane.b32.xlu0 %v257, 111
        %v388 = vpop.permute.xlu0 %387
        %389 = vrot.lane.b32.xlu0 %v258, 111
        %v390 = vpop.permute.xlu0 %389
        %vm391 = vcmp.lt.s32.totalorder %v271, 111
        %v392 = vsel %vm391, %v388, %v390
        %v393 = vsel %vm391, %v390, %v388
        %v394 = vlaneseq
        %v395 = vshrl.u32 %v394, 7
        %v396 = vsub.s32 0, %v395
        %v397 = vrot.slane %v264, %v396
        %v398 = vlaneseq
        %v399 = vshrl.u32 %v398, 7
        %v400 = vsub.s32 0, %v399
        %v401 = vrot.slane %v265, %v400
        %v402 = vmul.f32 %v392, %v397
        %v403 = vmul.f32 %v393, %v401
        %v404 = vpack.c.bf16 %v300, %v283
        %v405 = vpack.c.bf16 %v301, %v284
        %v406 = vpack.c.bf16 %v334, %v317
        %v407 = vpack.c.bf16 %v335, %v318
        %v408 = vpack.c.bf16 %v351, %v257
        %v409 = vpack.c.bf16 %v352, %v258
        %v410 = vpack.c.bf16 %v385, %v368
        %v411 = vpack.c.bf16 %v386, %v369
        %v412 = vpack.c.bf16 %v402, %v402
        %v413 = vpack.c.bf16 %v403, %v403
        %415 = vset.pattern.permute.xlu0 0
        %416 = vperm.xlu0 %415, %v261
        %v417 = vpop.permute.xlu0 %416
        %vm419 = vcmask 588800
        %v421 = vsel %vm419, %v259, 0
        %vm423 = vcmask 1043456
        %v425 = vsel %vm423, %v412, 0
        %v428 = vsel %vm423, %v413, 0
        %430 = vmatprep.subr.bf16.mxu0 0
        %431 = vmatpush1.bf16.msra.mxu0 0
        %432 = vmatprep.subr.bf16.mxu0 0
        %433 = vmatpush1.bf16.msra.mxu0 0
        %434 = vmatprep.subr.bf16.mxu0 0
        %435 = vmatpush1.bf16.msra.mxu0 0
        %436 = vmatprep.subr.bf16.mxu0 %v428
        %437 = vmatpush1.bf16.msra.mxu0 %v425
        %438 = vmatprep.subr.bf16.mxu0 %v411
        %439 = vmatpush1.bf16.msra.mxu0 %v410
        %440 = vmatprep.subr.bf16.mxu0 %v409
        %441 = vmatpush1.bf16.msra.mxu0 %v408
        %442 = vmatprep.subr.bf16.mxu0 %v407
        %443 = vmatpush1.bf16.msra.mxu0 %v406
        %444 = vmatprep.subr.bf16.mxu0 %v405
        %445 = vmatpush1.bf16.msra.mxu0 %v404
        %446 = vmatprep.subr.bf16.mxu0 0
        %447 = vmatpush2.bf16.msra.mxu0 0
        %448 = vmatprep.subr.bf16.mxu0 0
        %449 = vmatpush2.bf16.msra.mxu0 0
        %450 = vmatprep.subr.bf16.mxu0 0
        %451 = vmatpush2.bf16.msra.mxu0 0
        %452 = vmatprep.subr.bf16.mxu0 0
        %453 = vmatpush2.bf16.msra.mxu0 0
        %454 = vmatprep.subr.bf16.mxu0 0
        %455 = vmatpush2.bf16.msra.mxu0 0
        %456 = vmatprep.subr.bf16.mxu0 0
        %457 = vmatpush2.bf16.msra.mxu0 0
        %458 = vmatprep.subr.bf16.mxu0 0
        %459 = vmatpush2.bf16.msra.mxu0 0
        %460 = vmatprep.subr.bf16.mxu0 0
        %461 = vmatpush2.bf16.msra.mxu0 0
        %462 = vmatprep.mubr.bf16.mxu0 0
        %463 = vmatmul.mubr.bf16.gmra.mxu0 %v421
        %v464 = vpop.f32.mrf.mxu0
        %v465 = vadd.f32 %v417, %v464
        %v466 = vpop.f32.mrf.mxu0
        %v467 = vadd.f32 %v417, %v466
        %v468 = vpop.f32.mrf.mxu0
        %v469 = vpop.f32.mrf.mxu0
        %470 = vdwg.mxu0
        %v471 = vmul.f32 %v465, 0.1
        %v472 = vmul.f32 %v467, 0.1
        %v473 = vmax.f32 %v465, %v471
        %v474 = vmax.f32 %v467, %v472
        %475 = vrot.lane.b32.xlu0 %v473, 17
        %v476 = vpop.permute.xlu0 %475
        %477 = vrot.lane.b32.xlu0 %v474, 17
        %v478 = vpop.permute.xlu0 %477
        %v479 = vsel %vm272, %v476, %v478
        %v480 = vsel %vm272, %v478, %v476
        %v481 = vmul.f32 %v480, %v278
        %v482 = vmul.f32 %v479, %v282
        %483 = vrot.lane.b32.xlu0 %v473, 16
        %v484 = vpop.permute.xlu0 %483
        %485 = vrot.lane.b32.xlu0 %v474, 16
        %v486 = vpop.permute.xlu0 %485
        %v487 = vsel %vm289, %v484, %v486
        %v488 = vsel %vm289, %v486, %v484
        %v489 = vmul.f32 %v488, %v295
        %v490 = vmul.f32 %v487, %v299
        %491 = vrot.lane.b32.xlu0 %v473, 15
        %v492 = vpop.permute.xlu0 %491
        %493 = vrot.lane.b32.xlu0 %v474, 15
        %v494 = vpop.permute.xlu0 %493
        %v495 = vsel %vm306, %v492, %v494
        %v496 = vsel %vm306, %v494, %v492
        %v497 = vmul.f32 %v496, %v312
        %v498 = vmul.f32 %v495, %v316
        %499 = vrot.lane.b32.xlu0 %v473, 1
        %v500 = vpop.permute.xlu0 %499
        %501 = vrot.lane.b32.xlu0 %v474, 1
        %v502 = vpop.permute.xlu0 %501
        %v503 = vsel %vm323, %v500, %v502
        %v504 = vsel %vm323, %v502, %v500
        %v505 = vmul.f32 %v504, %v329
        %v506 = vmul.f32 %v503, %v333
        %507 = vrot.lane.b32.xlu0 %v473, 127
        %v508 = vpop.permute.xlu0 %507
        %509 = vrot.lane.b32.xlu0 %v474, 127
        %v510 = vpop.permute.xlu0 %509
        %v511 = vsel %vm340, %v508, %v510
        %v512 = vsel %vm340, %v510, %v508
        %v513 = vmul.f32 %v511, %v346
        %v514 = vmul.f32 %v512, %v350
        %515 = vrot.lane.b32.xlu0 %v473, 113
        %v516 = vpop.permute.xlu0 %515
        %517 = vrot.lane.b32.xlu0 %v474, 113
        %v518 = vpop.permute.xlu0 %517
        %v519 = vsel %vm357, %v516, %v518
        %v520 = vsel %vm357, %v518, %v516
        %v521 = vmul.f32 %v519, %v363
        %v522 = vmul.f32 %v520, %v367
        %523 = vrot.lane.b32.xlu0 %v473, 112
        %v524 = vpop.permute.xlu0 %523
        %525 = vrot.lane.b32.xlu0 %v474, 112
        %v526 = vpop.permute.xlu0 %525
        %v527 = vsel %vm374, %v524, %v526
        %v528 = vsel %vm374, %v526, %v524
        %v529 = vmul.f32 %v527, %v380
        %v530 = vmul.f32 %v528, %v384
        %531 = vrot.lane.b32.xlu0 %v473, 111
        %v532 = vpop.permute.xlu0 %531
        %533 = vrot.lane.b32.xlu0 %v474, 111
        %v534 = vpop.permute.xlu0 %533
        %v535 = vsel %vm391, %v532, %v534
        %v536 = vsel %vm391, %v534, %v532
        %v537 = vmul.f32 %v535, %v397
        %v538 = vmul.f32 %v536, %v401
        %v539 = vpack.c.bf16 %v489, %v481
        %v540 = vpack.c.bf16 %v490, %v482
        %v541 = vpack.c.bf16 %v505, %v497
        %v542 = vpack.c.bf16 %v506, %v498
        %v543 = vpack.c.bf16 %v513, %v473
        %v544 = vpack.c.bf16 %v514, %v474
        %v545 = vpack.c.bf16 %v529, %v521
        %v546 = vpack.c.bf16 %v530, %v522
        %v547 = vpack.c.bf16 %v537, %v537
        %v548 = vpack.c.bf16 %v538, %v538
        %549 = vset.pattern.permute.xlu0 1
        %550 = vperm.xlu0 %549, %v261
        %v551 = vpop.permute.xlu0 %550
        %v554 = vsel %vm419, %v260, 0
        %v557 = vsel %vm423, %v547, 0
        %v560 = vsel %vm423, %v548, 0
        %562 = vmatprep.subr.bf16.mxu0 0
        %563 = vmatpush1.bf16.msra.mxu0 0
        %564 = vmatprep.subr.bf16.mxu0 0
        %565 = vmatpush1.bf16.msra.mxu0 0
        %566 = vmatprep.subr.bf16.mxu0 0
        %567 = vmatpush1.bf16.msra.mxu0 0
        %568 = vmatprep.subr.bf16.mxu0 %v560
        %569 = vmatpush1.bf16.msra.mxu0 %v557
        %570 = vmatprep.subr.bf16.mxu0 %v546
        %571 = vmatpush1.bf16.msra.mxu0 %v545
        %572 = vmatprep.subr.bf16.mxu0 %v544
        %573 = vmatpush1.bf16.msra.mxu0 %v543
        %574 = vmatprep.subr.bf16.mxu0 %v542
        %575 = vmatpush1.bf16.msra.mxu0 %v541
        %576 = vmatprep.subr.bf16.mxu0 %v540
        %577 = vmatpush1.bf16.msra.mxu0 %v539
        %578 = vmatprep.subr.bf16.mxu0 0
        %579 = vmatpush2.bf16.msra.mxu0 0
        %580 = vmatprep.subr.bf16.mxu0 0
        %581 = vmatpush2.bf16.msra.mxu0 0
        %582 = vmatprep.subr.bf16.mxu0 0
        %583 = vmatpush2.bf16.msra.mxu0 0
        %584 = vmatprep.subr.bf16.mxu0 0
        %585 = vmatpush2.bf16.msra.mxu0 0
        %586 = vmatprep.subr.bf16.mxu0 0
        %587 = vmatpush2.bf16.msra.mxu0 0
        %588 = vmatprep.subr.bf16.mxu0 0
        %589 = vmatpush2.bf16.msra.mxu0 0
        %590 = vmatprep.subr.bf16.mxu0 0
        %591 = vmatpush2.bf16.msra.mxu0 0
        %592 = vmatprep.subr.bf16.mxu0 0
        %593 = vmatpush2.bf16.msra.mxu0 0
        %594 = vmatprep.mubr.bf16.mxu0 0
        %595 = vmatmul.mubr.bf16.gmra.mxu0 %v554
        %v596 = vpop.f32.mrf.mxu0
        %v597 = vadd.f32 %v551, %v596
        %v598 = vpop.f32.mrf.mxu0
        %v599 = vadd.f32 %v551, %v598
        %v600 = vpop.f32.mrf.mxu0
        %v601 = vpop.f32.mrf.mxu0
        %602 = vdwg.mxu0
        %v603 = vmul.f32 %v597, 0.1
        %v604 = vmul.f32 %v599, 0.1
        %v605 = vmax.f32 %v597, %v603
        %v606 = vmax.f32 %v599, %v604
        %607 = vst [vmem:[%s255] sm:$0xff] %v605
        %608 = vst [vmem:[%s255 + $0x8] sm:$0xff] %v606
        %s609 = sand.u32 %s141, 1
        %s610 = scalar_lea.sflag [#allocation4], %s609
        %s611 = sand.u32 %s141, 1
        %s612 = smul.addr %s611, 16
        %s613 = scalar_lea.vmem [#allocation7], %s612
        // Predicated region
        $region49: #{tpu_custom_call.1} parent=39 // pred_check
          %p614 = pneg %p151
        $region50: #{tpu_custom_call.1} parent=39 // pred_check_branch
          %616 = sbr.rel (%p614) target = $region52
        $region51: #{tpu_custom_call.1} parent=39 // pred_region
          %s618 = ssub.s32 256, 256
          %619 = vsyncadd %s610, %s618
          %s620 = smul.addr %s23, 2
          %s621 = smul.addr %s620, 128
          %s622 = scalar_lea.hbm %s5, %s621
          %s624 = sshll.u32 %s613, 4
          %s625 = int_to_ptr.vmem [resolvable:$true] %s624
          %627 = dma.vmem_to_hbm [thread:$0]  %s625, 256, %s622, %s610
        $region52: #{tpu_custom_call.1} parent=39 // pred_fallthru
          _
      $region40: #{tpu_custom_call.1} parent=5 // pred_fallthru
        _
      %p628 = scmp.le.s32.totalorder 2, %s18
      // Predicated region
      $region53: #{tpu_custom_call.1} parent=5 // pred_check
        %p629 = pneg %p628
      $region54: #{tpu_custom_call.1} parent=5 // pred_check_branch
        %631 = sbr.rel (%p629) target = $region56
      $region55: #{tpu_custom_call.1} parent=5 // pred_region
        %s632 = ssub.s32 %s18, 2
        // Predicated region
        $region57: #{tpu_custom_call.1} parent=55 // pred_check
          %p633 = pneg %p157
        $region58: #{tpu_custom_call.1} parent=55 // pred_check_branch
          %635 = sbr.rel (%p633) target = $region60
        $region59: #{tpu_custom_call.1} parent=55 // pred_region
          %s636 = sand.u32 %s142, 1
          %s637 = scalar_lea.sflag [#allocation4], %s636
          %s638 = sand.u32 %s142, 1
          %s639 = smul.addr %s638, 16
          %s640 = scalar_lea.vmem [#allocation7], %s639
          %641 = dma.done %s637, 256
        $region60: #{tpu_custom_call.1} parent=55 // pred_fallthru
          _
      $region56: #{tpu_custom_call.1} parent=5 // pred_fallthru
        _
    $region6: #{tpu_custom_call.1} parent=1 // loop_footer
      %s22 = sadd.s32 1, %s18
    $region7: #{tpu_custom_call.1} parent=1 // loop_footer_branch
      %17 = sbr.rel target = $region3
    $region8: #{tpu_custom_call.1} parent=1 // loop_exit
      _
    %642 = vsyncpa [#allocation3], 1
    %s643 = scalar_lea.sflag [#allocation3], 1
    %644 = vsyncpa %s643, 1
    %645 = vsyncpa [#allocation6], 1
    %646 = vsyncpa [#allocation4], 1
    %s647 = scalar_lea.sflag [#allocation4], 1
    %648 = vsyncpa %s647, 1

</llo_original>
